<compile_context>
chip_gen: v6e
topology: v6e:2x2x1
jax: 0.10.0
libtpu: 0.0.40
codegen_flags: <defaults>
</compile_context>

<pallas_src>
import functools

import jax
import jax.numpy as jnp
from jax.experimental import pallas as pl
from jax.experimental.pallas import tpu as pltpu

KH, KW = 3, 3     # kernel size from nn.Conv2d(3, 6, 3)
CIN, COUT = 3, 6  # in/out channels


def _conv2d_kernel(x_ref, w_ref, b_ref, o_ref, *, H, W):
    """Valid, stride-1 Conv2d(CIN->COUT, KHxKW) via im2col + one MXU matmul.

    x_ref : (N, CIN, H*W)       VMEM, NCHW flattened over (H, W)
    w_ref : (COUT, KH*KW*CIN)   VMEM, column order (kh, kw, ci)
    b_ref : (COUT, 1)           VMEM
    o_ref : (N, COUT, PW)       VMEM, PW = (OH-1)*W + OW; column j = oh*W + ow
                                (columns with ow >= OW hold junk, dropped in
                                 the wrapper)
    """
    N = x_ref.shape[0]
    OH = H - KH + 1
    OW = W - KW + 1
    PW = (OH - 1) * W + OW          # 222 for H = W = 16: lane-dense rows

    w = w_ref[...]                  # (COUT, 27) — whole weight loaded once
    b = b_ref[...]                  # (COUT, 1)

    for n in range(N):              # N is static; fully unrolled
        x_n = x_ref[n]              # (CIN, H*W) — one load per image
        # im2col: each (kh, kw) offset is a lane-offset window of the
        # flattened image.  Window column j maps to output pixel
        # (oh, ow) = (j // W, j % W); for ow < OW it equals x[ci, oh+kh, ow+kw].
        windows = []
        for kh in range(KH):
            for kw in range(KW):
                off = kh * W + kw                       # max off + PW == H*W
                windows.append(x_n[:, off:off + PW])    # (CIN, PW)
        patches = jnp.concatenate(windows, axis=0)      # (KH*KW*CIN, PW)
        # Single MXU matmul replaces the 27 VPU broadcast-MACs.
        acc = jnp.dot(w, patches, preferred_element_type=jnp.float32)
        o_ref[n] = (acc + b).astype(o_ref.dtype)        # lane-dense store


def mymodel_forward(x_nchw, weight_oihw, bias):
    """Equivalent of Mymodel.forward: Conv2d(3, 6, 3), stride=1, no padding."""
    N, C, H, W = x_nchw.shape
    assert C == CIN and H >= KH and W >= KW
    OH, OW = H - KH + 1, W - KW + 1
    PW = (OH - 1) * W + OW

    # Free reshapes only — no activation transposes / HBM round trips.
    x2 = x_nchw.reshape(N, CIN, H * W)
    # (COUT, CIN, KH, KW) -> (COUT, KH, KW, CIN) -> (COUT, 27): tiny constant.
    w2 = jnp.transpose(weight_oihw, (0, 2, 3, 1)).reshape(COUT, KH * KW * CIN)
    b2 = bias.reshape(COUT, 1)

    out = pl.pallas_call(
        functools.partial(_conv2d_kernel, H=H, W=W),
        out_shape=jax.ShapeDtypeStruct((N, COUT, PW), x_nchw.dtype),
        in_specs=[
            pl.BlockSpec(memory_space=pltpu.MemorySpace.VMEM),
            pl.BlockSpec(memory_space=pltpu.MemorySpace.VMEM),
            pl.BlockSpec(memory_space=pltpu.MemorySpace.VMEM),
        ],
        out_specs=pl.BlockSpec(memory_space=pltpu.MemorySpace.VMEM),
    )(x2, w2, b2)

    # Un-flatten: pad flat rows back to OH*W, split (OH, W), drop the KW-1
    # junk columns.  Reshape is free; pad+slice is a tiny fused copy (no
    # transpose).
    out = jnp.pad(out, ((0, 0), (0, 0), (0, W - OW)))
    return out.reshape(N, COUT, OH, W)[:, :, :, :OW]


if __name__ == "__main__":
    key = jax.random.PRNGKey(0)
    kx, kw_key, kb_key = jax.random.split(key, 3)

    # Small input consistent with Conv2d(3, 6, 3): batch=2, C=3, 16x16 spatial
    N, H, W = 2, 16, 16
    x = jax.random.normal(kx, (N, CIN, H, W), dtype=jnp.float32)

    # Deterministic init mimicking PyTorch's default Conv2d init bounds
    fan_in = CIN * KH * KW
    bound = 1.0 / (fan_in ** 0.5)
    weight = jax.random.uniform(kw_key, (COUT, CIN, KH, KW), jnp.float32, -bound, bound)
    bias = jax.random.uniform(kb_key, (COUT,), jnp.float32, -bound, bound)

    y = jax.jit(mymodel_forward)(x, weight, bias)
    y = jax.block_until_ready(y)
    assert y.shape == (N, COUT, H - KH + 1, W - KW + 1), y.shape

    # Cross-check against XLA's native convolution (NCHW, OIHW, valid, stride 1)
    y_ref = jax.lax.conv_general_dilated(
        x, weight, window_strides=(1, 1), padding="VALID",
        dimension_numbers=("NCHW", "OIHW", "NCHW"),
    ) + bias.reshape(1, COUT, 1, 1)
    assert jnp.allclose(y, y_ref, atol=1e-3, rtol=1e-3), float(jnp.max(jnp.abs(y - y_ref)))

    print("KERNEL_OK")
</pallas_src>

<mosaic_0001>
module attributes {stable_mosaic.version = 11 : i64} {
  func.func @_conv2d_kernel(%arg0: memref<2x3x256xf32, #tpu.memory_space<vmem>>, %arg1: memref<6x27xf32, #tpu.memory_space<vmem>>, %arg2: memref<6x1xf32, #tpu.memory_space<vmem>>, %arg3: memref<2x6x222xf32, #tpu.memory_space<vmem>>) attributes {dimension_semantics = [], scalar_prefetch = 0 : i64, scratch_operands = 0 : i64, tpu.core_type = #tpu.core_type<tc>} {
    %c0 = arith.constant 0 : index
    %c0_0 = arith.constant 0 : index
    %0 = vector.load %arg1[%c0, %c0_0] : memref<6x27xf32, #tpu.memory_space<vmem>>, vector<6x27xf32>
    %c0_1 = arith.constant 0 : index
    %c0_2 = arith.constant 0 : index
    %1 = vector.load %arg2[%c0_1, %c0_2] : memref<6x1xf32, #tpu.memory_space<vmem>>, vector<6x1xf32>
    %c0_3 = arith.constant 0 : index
    %c0_4 = arith.constant 0 : index
    %c0_5 = arith.constant 0 : index
    %2 = vector.load %arg0[%c0_3, %c0_4, %c0_5] : memref<2x3x256xf32, #tpu.memory_space<vmem>>, vector<1x3x256xf32>
    %3 = vector.shape_cast %2 : vector<1x3x256xf32> to vector<3x256xf32>
    %4 = vector.extract_strided_slice %3 {offsets = [0, 0], sizes = [3, 222], strides = [1, 1]} : vector<3x256xf32> to vector<3x222xf32>
    %5 = vector.extract_strided_slice %3 {offsets = [0, 1], sizes = [3, 222], strides = [1, 1]} : vector<3x256xf32> to vector<3x222xf32>
    %6 = vector.extract_strided_slice %3 {offsets = [0, 2], sizes = [3, 222], strides = [1, 1]} : vector<3x256xf32> to vector<3x222xf32>
    %7 = vector.extract_strided_slice %3 {offsets = [0, 16], sizes = [3, 222], strides = [1, 1]} : vector<3x256xf32> to vector<3x222xf32>
    %8 = vector.extract_strided_slice %3 {offsets = [0, 17], sizes = [3, 222], strides = [1, 1]} : vector<3x256xf32> to vector<3x222xf32>
    %9 = vector.extract_strided_slice %3 {offsets = [0, 18], sizes = [3, 222], strides = [1, 1]} : vector<3x256xf32> to vector<3x222xf32>
    %10 = vector.extract_strided_slice %3 {offsets = [0, 32], sizes = [3, 222], strides = [1, 1]} : vector<3x256xf32> to vector<3x222xf32>
    %11 = vector.extract_strided_slice %3 {offsets = [0, 33], sizes = [3, 222], strides = [1, 1]} : vector<3x256xf32> to vector<3x222xf32>
    %12 = vector.extract_strided_slice %3 {offsets = [0, 34], sizes = [3, 222], strides = [1, 1]} : vector<3x256xf32> to vector<3x222xf32>
    %13 = tpu.concatenate %4, %5, %6, %7, %8, %9, %10, %11, %12 in 0 : vector<3x222xf32>, vector<3x222xf32>, vector<3x222xf32>, vector<3x222xf32>, vector<3x222xf32>, vector<3x222xf32>, vector<3x222xf32>, vector<3x222xf32>, vector<3x222xf32> -> vector<27x222xf32>
    %cst = arith.constant dense<0.000000e+00> : vector<6x222xf32>
    %14 = tpu.matmul %0, %13, %cst {dimension_numbers = #tpu.dot_dimension_numbers<[1], [0], [0], [1], [0, 0, 1, 1], [], []>} : vector<6x27xf32>, vector<27x222xf32>, vector<6x222xf32> -> vector<6x222xf32>
    %15 = vector.broadcast %1 : vector<6x1xf32> to vector<6x222xf32>
    %16 = arith.addf %14, %15 : vector<6x222xf32>
    %c0_6 = arith.constant 0 : index
    %c0_7 = arith.constant 0 : index
    %c0_8 = arith.constant 0 : index
    %17 = vector.load %arg3[%c0_6, %c0_7, %c0_8] : memref<2x6x222xf32, #tpu.memory_space<vmem>>, vector<1x6x222xf32>
    %18 = vector.shape_cast %17 : vector<1x6x222xf32> to vector<6x222xf32>
    %19 = vector.shape_cast %16 : vector<6x222xf32> to vector<1x6x222xf32>
    tpu.vector_store %arg3[%c0_6, %c0_7, %c0_8], %19 {strides = array<i32>} : memref<2x6x222xf32, #tpu.memory_space<vmem>>, vector<1x6x222xf32>,
    %c1 = arith.constant 1 : index
    %c0_9 = arith.constant 0 : index
    %c0_10 = arith.constant 0 : index
    %20 = vector.load %arg0[%c1, %c0_9, %c0_10] : memref<2x3x256xf32, #tpu.memory_space<vmem>>, vector<1x3x256xf32>
    %21 = vector.shape_cast %20 : vector<1x3x256xf32> to vector<3x256xf32>
    %22 = vector.extract_strided_slice %21 {offsets = [0, 0], sizes = [3, 222], strides = [1, 1]} : vector<3x256xf32> to vector<3x222xf32>
    %23 = vector.extract_strided_slice %21 {offsets = [0, 1], sizes = [3, 222], strides = [1, 1]} : vector<3x256xf32> to vector<3x222xf32>
    %24 = vector.extract_strided_slice %21 {offsets = [0, 2], sizes = [3, 222], strides = [1, 1]} : vector<3x256xf32> to vector<3x222xf32>
    %25 = vector.extract_strided_slice %21 {offsets = [0, 16], sizes = [3, 222], strides = [1, 1]} : vector<3x256xf32> to vector<3x222xf32>
    %26 = vector.extract_strided_slice %21 {offsets = [0, 17], sizes = [3, 222], strides = [1, 1]} : vector<3x256xf32> to vector<3x222xf32>
    %27 = vector.extract_strided_slice %21 {offsets = [0, 18], sizes = [3, 222], strides = [1, 1]} : vector<3x256xf32> to vector<3x222xf32>
    %28 = vector.extract_strided_slice %21 {offsets = [0, 32], sizes = [3, 222], strides = [1, 1]} : vector<3x256xf32> to vector<3x222xf32>
    %29 = vector.extract_strided_slice %21 {offsets = [0, 33], sizes = [3, 222], strides = [1, 1]} : vector<3x256xf32> to vector<3x222xf32>
    %30 = vector.extract_strided_slice %21 {offsets = [0, 34], sizes = [3, 222], strides = [1, 1]} : vector<3x256xf32> to vector<3x222xf32>
    %31 = tpu.concatenate %22, %23, %24, %25, %26, %27, %28, %29, %30 in 0 : vector<3x222xf32>, vector<3x222xf32>, vector<3x222xf32>, vector<3x222xf32>, vector<3x222xf32>, vector<3x222xf32>, vector<3x222xf32>, vector<3x222xf32>, vector<3x222xf32> -> vector<27x222xf32>
    %cst_11 = arith.constant dense<0.000000e+00> : vector<6x222xf32>
    %32 = tpu.matmul %0, %31, %cst_11 {dimension_numbers = #tpu.dot_dimension_numbers<[1], [0], [0], [1], [0, 0, 1, 1], [], []>} : vector<6x27xf32>, vector<27x222xf32>, vector<6x222xf32> -> vector<6x222xf32>
    %33 = vector.broadcast %1 : vector<6x1xf32> to vector<6x222xf32>
    %34 = arith.addf %32, %33 : vector<6x222xf32>
    %c1_12 = arith.constant 1 : index
    %c0_13 = arith.constant 0 : index
    %c0_14 = arith.constant 0 : index
    %35 = vector.load %arg3[%c1_12, %c0_13, %c0_14] : memref<2x6x222xf32, #tpu.memory_space<vmem>>, vector<1x6x222xf32>
    %36 = vector.shape_cast %35 : vector<1x6x222xf32> to vector<6x222xf32>
    %37 = vector.shape_cast %34 : vector<6x222xf32> to vector<1x6x222xf32>
    tpu.vector_store %arg3[%c1_12, %c0_13, %c0_14], %37 {strides = array<i32>} : memref<2x6x222xf32, #tpu.memory_space<vmem>>, vector<1x6x222xf32>,
    return
  }
}

</mosaic_0001>

<llo_original>
// kernel: mymodel_forward.1
$region0: #{mymodel_forward.1}
  #allocation0 [shape = 'u32[]', space=smem, size = 0x4, offset = 0x4, fixed_abs, tag = 'smem constant byte address 0x4 - core index']
  #allocation1 [shape = 'u32[144,128]{1,0:T(1,128)}', space=vmem, size = 0x12000, scoped, tag = 'internal scratch']
  %s0 = inlined_call_operand.vmem [shape: f32[2,3,256], index: 0, kind: input, shape index: {}]
  %s1 = inlined_call_operand.vmem [shape: f32[6,27], index: 1, kind: input, shape index: {}]
  %s2 = inlined_call_operand.vmem [shape: f32[6,1], index: 2, kind: input, shape index: {}]
  %s3 = inlined_call_operand.vmem [shape: f32[2,6,222], index: 3, kind: output, shape index: {}]
  %s4 = sld [smem:[#allocation0]]
  $region22: #{mymodel_forward.1} parent=0
    _
  %s6 = ssub.s32 1, %s4
  %s7 = scalar_select 0, %s6, %s4
  // Predicated region
  $region2: #{mymodel_forward.1} parent=0 // pred_check
    _
  $region3: #{mymodel_forward.1} parent=0 // pred_check_branch
    %9 = sbr.rel (0) target = $region5
  $region4: #{mymodel_forward.1} parent=0 // pred_region
    _
  $region5: #{mymodel_forward.1} parent=0 // pred_fallthru
    _
  // Predicated region
  $region6: #{mymodel_forward.1} parent=0 // pred_check
    _
  $region7: #{mymodel_forward.1} parent=0 // pred_check_branch
    %11 = sbr.rel (0) target = $region9
  $region8: #{mymodel_forward.1} parent=0 // pred_region
    _
  $region9: #{mymodel_forward.1} parent=0 // pred_fallthru
    _
  // Predicated region
  $region10: #{mymodel_forward.1} parent=0 // pred_check
    _
  $region11: #{mymodel_forward.1} parent=0 // pred_check_branch
    %13 = sbr.rel (0) target = $region13
  $region12: #{mymodel_forward.1} parent=0 // pred_region
    _
  $region13: #{mymodel_forward.1} parent=0 // pred_fallthru
    _
  %v14 = vld [vmem:[%s1] sm:$0x3f]
  %v15 = vld [vmem:[%s2] sm:$0x3f]
  %v16 = vld [vmem:[%s0] sm:$0x77]
  %v18 = vcombine.high %v16, %v16
  %v20 = vrot.slane %v16, 5
  %v21 = vrot.slane %v18, 5
  %22 = vrot.lane.b32.xlu0 %v20, 127
  %v23 = vpop.permute.xlu0 %22
  %24 = vrot.lane.b32.xlu0 %v21, 127
  %v25 = vpop.permute.xlu0 %24
  %vm26 = vcmask 1039360
  %v27 = vsel %vm26, %v23, %v25
  %v30 = vrot.slane %v16, 2
  %v31 = vrot.slane %v18, 2
  %32 = vrot.lane.b32.xlu0 %v30, 126
  %v33 = vpop.permute.xlu0 %32
  %34 = vrot.lane.b32.xlu0 %v31, 126
  %v35 = vpop.permute.xlu0 %34
  %vm36 = vcmask 1031168
  %v37 = vsel %vm36, %v33, %v35
  %v40 = vrot.slane %v16, 7
  %v41 = vrot.slane %v18, 7
  %42 = vrot.lane.b32.xlu0 %v40, 112
  %v43 = vpop.permute.xlu0 %42
  %44 = vrot.lane.b32.xlu0 %v41, 112
  %v45 = vpop.permute.xlu0 %44
  %vm46 = vcmask 916480
  %v47 = vsel %vm46, %v43, %v45
  %v50 = vcombine.low %v16, %v16
  %51 = vrot.lane.b32.xlu0 %v50, 111
  %v52 = vpop.permute.xlu0 %51
  %53 = vrot.lane.b32.xlu0 %v16, 111
  %v54 = vpop.permute.xlu0 %53
  %vm55 = vcmask 908288
  %v56 = vsel %vm55, %v52, %v54
  %v59 = vrot.slane %v16, 1
  %v60 = vrot.slane %v18, 1
  %61 = vrot.lane.b32.xlu0 %v59, 110
  %v62 = vpop.permute.xlu0 %61
  %63 = vrot.lane.b32.xlu0 %v60, 110
  %v64 = vpop.permute.xlu0 %63
  %vm65 = vcmask 900096
  %v66 = vsel %vm65, %v62, %v64
  %v69 = vrot.slane %v16, 6
  %v70 = vrot.slane %v18, 6
  %71 = vrot.lane.b32.xlu0 %v69, 96
  %v72 = vpop.permute.xlu0 %71
  %73 = vrot.lane.b32.xlu0 %v70, 96
  %v74 = vpop.permute.xlu0 %73
  %vm75 = vcmask 785408
  %v76 = vsel %vm75, %v72, %v74
  %v79 = vrot.slane %v16, 3
  %v80 = vrot.slane %v18, 3
  %81 = vrot.lane.b32.xlu0 %v79, 95
  %v82 = vpop.permute.xlu0 %81
  %83 = vrot.lane.b32.xlu0 %v80, 95
  %v84 = vpop.permute.xlu0 %83
  %vm85 = vcmask 777216
  %v86 = vsel %vm85, %v82, %v84
  %89 = vrot.lane.b32.xlu0 %v16, 94
  %v90 = vpop.permute.xlu0 %89
  %91 = vrot.lane.b32.xlu0 %v18, 94
  %v92 = vpop.permute.xlu0 %91
  %vm93 = vcmask 769024
  %v94 = vsel %vm93, %v90, %v92
  %vm95 = vcmask 1042432
  %v96 = vsel %vm95, %v16, %v27
  %v97 = vsel %vm95, %v18, %v25
  %vm98 = vcmask 1045504
  %v99 = vsel %vm98, %v96, %v37
  %v100 = vsel %vm98, %v97, %v35
  %vm101 = vcmask 1040384
  %v102 = vsel %vm101, %v37, %v47
  %v103 = vsel %vm101, %v35, %v45
  %vm104 = vcmask 1043456
  %v105 = vsel %vm104, %v102, %v56
  %v106 = vsel %vm104, %v103, %v54
  %vm107 = vcmask 1046528
  %v108 = vsel %vm107, %v105, %v66
  %v109 = vsel %vm107, %v106, %v64
  %vm110 = vcmask 1041408
  %v111 = vsel %vm110, %v66, %v76
  %v112 = vsel %vm110, %v64, %v74
  %vm113 = vcmask 1044480
  %v114 = vsel %vm113, %v111, %v86
  %v115 = vsel %vm113, %v112, %v84
  %117 = vset.pattern.permute.xlu0 0
  %118 = vperm.xlu0 %117, %v15
  %v119 = vpop.permute.xlu0 %118
  %vm121 = vcmask 220160
  %v123 = vsel %vm121, %v14, 0
  %v125 = vsel %vm95, %v94, 0
  %v127 = vsel %vm95, %v92, 0
  %129 = vmatprep.subr.mxu0 0.0
  %130 = vmatpush1.msra.mxu0 0.0
  %131 = vmatprep.subr.mxu0 0.0
  %132 = vmatpush1.msra.mxu0 0.0
  %133 = vmatprep.subr.mxu0 0.0
  %134 = vmatpush1.msra.mxu0 0.0
  %135 = vmatprep.subr.mxu0 0.0
  %136 = vmatpush1.msra.mxu0 0.0
  %137 = vmatprep.subr.mxu0 0.0
  %138 = vmatpush1.msra.mxu0 0.0
  %139 = vmatprep.subr.mxu0 0.0
  %140 = vmatpush1.msra.mxu0 0.0
  %141 = vmatprep.subr.mxu0 0.0
  %142 = vmatpush1.msra.mxu0 0.0
  %143 = vmatprep.subr.mxu0 0.0
  %144 = vmatpush1.msra.mxu0 0.0
  %145 = vmatprep.subr.mxu0 0.0
  %146 = vmatpush1.msra.mxu0 0.0
  %147 = vmatprep.subr.mxu0 0.0
  %148 = vmatpush1.msra.mxu0 0.0
  %149 = vmatprep.subr.mxu0 0.0
  %150 = vmatpush1.msra.mxu0 0.0
  %151 = vmatprep.subr.mxu0 0.0
  %152 = vmatpush1.msra.mxu0 0.0
  %153 = vmatprep.subr.mxu0 %v127
  %154 = vmatpush1.msra.mxu0 %v125
  %155 = vmatprep.subr.mxu0 %v115
  %156 = vmatpush1.msra.mxu0 %v114
  %157 = vmatprep.subr.mxu0 %v109
  %158 = vmatpush1.msra.mxu0 %v108
  %159 = vmatprep.subr.mxu0 %v100
  %160 = vmatpush1.msra.mxu0 %v99
  %161 = vmatprep.subr.mxu0 0.0
  %162 = vmatpush2.msra.mxu0 0.0
  %163 = vmatprep.subr.mxu0 0.0
  %164 = vmatpush2.msra.mxu0 0.0
  %165 = vmatprep.subr.mxu0 0.0
  %166 = vmatpush2.msra.mxu0 0.0
  %167 = vmatprep.subr.mxu0 0.0
  %168 = vmatpush2.msra.mxu0 0.0
  %169 = vmatprep.subr.mxu0 0.0
  %170 = vmatpush2.msra.mxu0 0.0
  %171 = vmatprep.subr.mxu0 0.0
  %172 = vmatpush2.msra.mxu0 0.0
  %173 = vmatprep.subr.mxu0 0.0
  %174 = vmatpush2.msra.mxu0 0.0
  %175 = vmatprep.subr.mxu0 0.0
  %176 = vmatpush2.msra.mxu0 0.0
  %177 = vmatprep.subr.mxu0 0.0
  %178 = vmatpush2.msra.mxu0 0.0
  %179 = vmatprep.subr.mxu0 0.0
  %180 = vmatpush2.msra.mxu0 0.0
  %181 = vmatprep.subr.mxu0 0.0
  %182 = vmatpush2.msra.mxu0 0.0
  %183 = vmatprep.subr.mxu0 0.0
  %184 = vmatpush2.msra.mxu0 0.0
  %185 = vmatprep.subr.mxu0 0.0
  %186 = vmatpush2.msra.mxu0 0.0
  %187 = vmatprep.subr.mxu0 0.0
  %188 = vmatpush2.msra.mxu0 0.0
  %189 = vmatprep.subr.mxu0 0.0
  %190 = vmatpush2.msra.mxu0 0.0
  %191 = vmatprep.subr.mxu0 0.0
  %192 = vmatpush2.msra.mxu0 0.0
  %193 = vmatprep.mubr.f32.mxu0 0.0
  %194 = vmatmul.mubr.f32.gmra.mxu0 %v123
  %v195 = vpop.f32.mrf.mxu0
  %v196 = vadd.f32 %v119, %v195
  %v197 = vpop.f32.mrf.mxu0
  %v198 = vadd.f32 %v119, %v197
  %199 = vdwg.mxu0
  %200 = vst [vmem:[%s3] sm:$0x3f] %v196
  %vm201 = vcmask 766976
  %202 = vst.msk [vmem:[%s3 + $0x8] sm:$0x3f] %vm201, %v198
  %s203 = scalar_lea.vmem %s0, 8
  %v204 = vld [vmem:[%s203] sm:$0x77]
  %v206 = vcombine.high %v204, %v204
  %v208 = vrot.slane %v204, 5
  %v209 = vrot.slane %v206, 5
  %210 = vrot.lane.b32.xlu0 %v208, 127
  %v211 = vpop.permute.xlu0 %210
  %212 = vrot.lane.b32.xlu0 %v209, 127
  %v213 = vpop.permute.xlu0 %212
  %v214 = vsel %vm26, %v211, %v213
  %v217 = vrot.slane %v204, 2
  %v218 = vrot.slane %v206, 2
  %219 = vrot.lane.b32.xlu0 %v217, 126
  %v220 = vpop.permute.xlu0 %219
  %221 = vrot.lane.b32.xlu0 %v218, 126
  %v222 = vpop.permute.xlu0 %221
  %v223 = vsel %vm36, %v220, %v222
  %v226 = vrot.slane %v204, 7
  %v227 = vrot.slane %v206, 7
  %228 = vrot.lane.b32.xlu0 %v226, 112
  %v229 = vpop.permute.xlu0 %228
  %230 = vrot.lane.b32.xlu0 %v227, 112
  %v231 = vpop.permute.xlu0 %230
  %v232 = vsel %vm46, %v229, %v231
  %v235 = vcombine.low %v204, %v204
  %236 = vrot.lane.b32.xlu0 %v235, 111
  %v237 = vpop.permute.xlu0 %236
  %238 = vrot.lane.b32.xlu0 %v204, 111
  %v239 = vpop.permute.xlu0 %238
  %v240 = vsel %vm55, %v237, %v239
  %v243 = vrot.slane %v204, 1
  %v244 = vrot.slane %v206, 1
  %245 = vrot.lane.b32.xlu0 %v243, 110
  %v246 = vpop.permute.xlu0 %245
  %247 = vrot.lane.b32.xlu0 %v244, 110
  %v248 = vpop.permute.xlu0 %247
  %v249 = vsel %vm65, %v246, %v248
  %v252 = vrot.slane %v204, 6
  %v253 = vrot.slane %v206, 6
  %254 = vrot.lane.b32.xlu0 %v252, 96
  %v255 = vpop.permute.xlu0 %254
  %256 = vrot.lane.b32.xlu0 %v253, 96
  %v257 = vpop.permute.xlu0 %256
  %v258 = vsel %vm75, %v255, %v257
  %v261 = vrot.slane %v204, 3
  %v262 = vrot.slane %v206, 3
  %263 = vrot.lane.b32.xlu0 %v261, 95
  %v264 = vpop.permute.xlu0 %263
  %265 = vrot.lane.b32.xlu0 %v262, 95
  %v266 = vpop.permute.xlu0 %265
  %v267 = vsel %vm85, %v264, %v266
  %270 = vrot.lane.b32.xlu0 %v204, 94
  %v271 = vpop.permute.xlu0 %270
  %272 = vrot.lane.b32.xlu0 %v206, 94
  %v273 = vpop.permute.xlu0 %272
  %v274 = vsel %vm93, %v271, %v273
  %v275 = vsel %vm95, %v204, %v214
  %v276 = vsel %vm95, %v206, %v213
  %v277 = vsel %vm98, %v275, %v223
  %v278 = vsel %vm98, %v276, %v222
  %v279 = vsel %vm101, %v223, %v232
  %v280 = vsel %vm101, %v222, %v231
  %v281 = vsel %vm104, %v279, %v240
  %v282 = vsel %vm104, %v280, %v239
  %v283 = vsel %vm107, %v281, %v249
  %v284 = vsel %vm107, %v282, %v248
  %v285 = vsel %vm110, %v249, %v258
  %v286 = vsel %vm110, %v248, %v257
  %v287 = vsel %vm113, %v285, %v267
  %v288 = vsel %vm113, %v286, %v266
  %v289 = vsel %vm95, %v274, 0
  %v291 = vsel %vm95, %v273, 0
  %293 = vmatprep.subr.mxu0 0.0
  %294 = vmatpush1.msra.mxu0 0.0
  %295 = vmatprep.subr.mxu0 0.0
  %296 = vmatpush1.msra.mxu0 0.0
  %297 = vmatprep.subr.mxu0 0.0
  %298 = vmatpush1.msra.mxu0 0.0
  %299 = vmatprep.subr.mxu0 0.0
  %300 = vmatpush1.msra.mxu0 0.0
  %301 = vmatprep.subr.mxu0 0.0
  %302 = vmatpush1.msra.mxu0 0.0
  %303 = vmatprep.subr.mxu0 0.0
  %304 = vmatpush1.msra.mxu0 0.0
  %305 = vmatprep.subr.mxu0 0.0
  %306 = vmatpush1.msra.mxu0 0.0
  %307 = vmatprep.subr.mxu0 0.0
  %308 = vmatpush1.msra.mxu0 0.0
  %309 = vmatprep.subr.mxu0 0.0
  %310 = vmatpush1.msra.mxu0 0.0
  %311 = vmatprep.subr.mxu0 0.0
  %312 = vmatpush1.msra.mxu0 0.0
  %313 = vmatprep.subr.mxu0 0.0
  %314 = vmatpush1.msra.mxu0 0.0
  %315 = vmatprep.subr.mxu0 0.0
  %316 = vmatpush1.msra.mxu0 0.0
  %317 = vmatprep.subr.mxu0 %v291
  %318 = vmatpush1.msra.mxu0 %v289
  %319 = vmatprep.subr.mxu0 %v288
  %320 = vmatpush1.msra.mxu0 %v287
  %321 = vmatprep.subr.mxu0 %v284
  %322 = vmatpush1.msra.mxu0 %v283
  %323 = vmatprep.subr.mxu0 %v278
  %324 = vmatpush1.msra.mxu0 %v277
  %325 = vmatprep.subr.mxu0 0.0
  %326 = vmatpush2.msra.mxu0 0.0
  %327 = vmatprep.subr.mxu0 0.0
  %328 = vmatpush2.msra.mxu0 0.0
  %329 = vmatprep.subr.mxu0 0.0
  %330 = vmatpush2.msra.mxu0 0.0
  %331 = vmatprep.subr.mxu0 0.0
  %332 = vmatpush2.msra.mxu0 0.0
  %333 = vmatprep.subr.mxu0 0.0
  %334 = vmatpush2.msra.mxu0 0.0
  %335 = vmatprep.subr.mxu0 0.0
  %336 = vmatpush2.msra.mxu0 0.0
  %337 = vmatprep.subr.mxu0 0.0
  %338 = vmatpush2.msra.mxu0 0.0
  %339 = vmatprep.subr.mxu0 0.0
  %340 = vmatpush2.msra.mxu0 0.0
  %341 = vmatprep.subr.mxu0 0.0
  %342 = vmatpush2.msra.mxu0 0.0
  %343 = vmatprep.subr.mxu0 0.0
  %344 = vmatpush2.msra.mxu0 0.0
  %345 = vmatprep.subr.mxu0 0.0
  %346 = vmatpush2.msra.mxu0 0.0
  %347 = vmatprep.subr.mxu0 0.0
  %348 = vmatpush2.msra.mxu0 0.0
  %349 = vmatprep.subr.mxu0 0.0
  %350 = vmatpush2.msra.mxu0 0.0
  %351 = vmatprep.subr.mxu0 0.0
  %352 = vmatpush2.msra.mxu0 0.0
  %353 = vmatprep.subr.mxu0 0.0
  %354 = vmatpush2.msra.mxu0 0.0
  %355 = vmatprep.subr.mxu0 0.0
  %356 = vmatpush2.msra.mxu0 0.0
  %357 = vmatprep.mubr.f32.mxu0 0.0
  %358 = vmatmul.mubr.f32.gmra.mxu0 %v123
  %v359 = vpop.f32.mrf.mxu0
  %v360 = vadd.f32 %v119, %v359
  %v361 = vpop.f32.mrf.mxu0
  %v362 = vadd.f32 %v119, %v361
  %363 = vdwg.mxu0
  %s364 = scalar_lea.vmem %s3, 16
  %365 = vst [vmem:[%s364] sm:$0x3f] %v360
  %366 = vst.msk [vmem:[%s364 + $0x8] sm:$0x3f] %vm201, %v362
  // Predicated region
  $region14: #{mymodel_forward.1} parent=0 // pred_check
    _
  $region15: #{mymodel_forward.1} parent=0 // pred_check_branch
    %368 = sbr.rel (0) target = $region17
  $region16: #{mymodel_forward.1} parent=0 // pred_region
    _
  $region17: #{mymodel_forward.1} parent=0 // pred_fallthru
    _
  // Predicated region
  $region18: #{mymodel_forward.1} parent=0 // pred_check
    _
  $region19: #{mymodel_forward.1} parent=0 // pred_check_branch
    %370 = sbr.rel (0) target = $region21
  $region20: #{mymodel_forward.1} parent=0 // pred_region
    _
  $region21: #{mymodel_forward.1} parent=0 // pred_fallthru
    _

</llo_original>
